<compile_context>
chip_gen: v7x
topology: tpu7x:2x2x1
jax: 0.10.0
libtpu: 0.0.40
codegen_flags: <defaults>
</compile_context>

<pallas_src>
import functools

import jax
import jax.numpy as jnp
from jax.experimental import pallas as pl
from jax.experimental.pallas import tpu as pltpu

# ----------------------------- synthetic config ------------------------------
N_Y = 4                    # params['n_y']
N_LATENT = 2               # params['n_latent_species']
N_X = 3                    # params['n_x']
N_Z = 5                    # params['n_z']
N_CONDITIONS = 2           # len(procdata.conditions)
DEVICE_DEPTH = 4           # procdata.device_depth
N_HIDDEN = 32              # params['n_hidden_decoder']
N_HIDDEN_PREC = 16         # params['n_hidden_decoder_precisions']
DEV1HOT_DIM = 7            # linear4 input size

N_STATE_OUT = 4 + N_LATENT                                                    # 6
N_IN_STATE = 4 + N_LATENT + N_X + N_Y + N_Z + N_CONDITIONS + DEVICE_DEPTH     # 24
N_IN_PREC = 4 + N_LATENT + 4 + N_X + N_Y + N_Z + N_CONDITIONS + DEVICE_DEPTH  # 28
N_PREC_OUT = 4

# ------------------ packed output rows (features on sublanes) -----------------
O_ACT = 0
O_DEG = O_ACT + N_STATE_OUT            # 6
O_PACT = O_DEG + N_STATE_OUT           # 12
O_PDEG = O_PACT + N_PREC_OUT           # 16
O_DEV = O_PDEG + N_PREC_OUT            # 20  (device offsets: NOT sigmoided)
N_OUT = O_DEV + N_Y                    # 24

# ----------------- single transposed parameter slab (pack once) ---------------
# Weights stored as W^T (out_features, in_features) so h = W^T @ x + b with the
# batch on the lane axis.  All row offsets are 8-aligned (sublane tiles).
R_SINP = 0          # rows  0:32  w_inp^T (32,24)  | col 24 = b_inp
R_PINP = 32         # rows 32:48  wp_inp^T(16,28)  | col 28 = bp_inp
R_DEV = 48          # rows 48:52  w4^T    (4,7)    (bias b4 folded into head bias)
R_HEAD = 56         # rows 56:80  fused head W2^T (24,52) | col 52 = fused head bias
H2_STATE = 0        # head cols  0:32  consume relu(state hidden)
H2_PREC = N_HIDDEN  # head cols 32:48  consume relu(precision hidden)
H2_DEV = N_HIDDEN + N_HIDDEN_PREC   # head cols 48:52 identity passthrough of devoff
C_B2 = H2_DEV + N_Y                 # 52: fused head bias column
SLAB_ROWS = 80
SLAB_COLS = 56


# --------------------------------- kernel ------------------------------------
def _decoder_kernel(dev_ref, xs_ref, xp_ref, slab_ref, out_ref):
    f32 = jnp.float32

    # parameter views (static slices of the VMEM-resident slab)
    w_inp_t = slab_ref[R_SINP:R_SINP + N_HIDDEN, 0:N_IN_STATE]            # (32, 24)
    b_inp = slab_ref[R_SINP:R_SINP + N_HIDDEN, N_IN_STATE:N_IN_STATE + 1]  # (32, 1)
    wp_inp_t = slab_ref[R_PINP:R_PINP + N_HIDDEN_PREC, 0:N_IN_PREC]        # (16, 28)
    bp_inp = slab_ref[R_PINP:R_PINP + N_HIDDEN_PREC, N_IN_PREC:N_IN_PREC + 1]
    w4_t = slab_ref[R_DEV:R_DEV + N_Y, 0:DEV1HOT_DIM]                      # (4, 7)
    w2_s = slab_ref[R_HEAD:R_HEAD + N_OUT, H2_STATE:H2_STATE + N_HIDDEN]   # (24, 32)
    w2_p = slab_ref[R_HEAD:R_HEAD + N_OUT, H2_PREC:H2_PREC + N_HIDDEN_PREC]  # (24, 16)
    w2_d = slab_ref[R_HEAD:R_HEAD + N_OUT, H2_DEV:H2_DEV + N_Y]            # (24, 4)
    b2 = slab_ref[R_HEAD:R_HEAD + N_OUT, C_B2:C_B2 + 1]                    # (24, 1)

    # first layers (batch on the 128-lane axis -> wide MXU N dim, full-lane loads)
    hs = jnp.maximum(
        jnp.dot(w_inp_t, xs_ref[...], preferred_element_type=f32) + b_inp, 0.0)   # (32, TB)
    hp = jnp.maximum(
        jnp.dot(wp_inp_t, xp_ref[...], preferred_element_type=f32) + bp_inp, 0.0)  # (16, TB)
    dv = jnp.dot(w4_t, dev_ref[...], preferred_element_type=f32)                   # (4, TB)

    # fused heads: rows 0:20 are the four sigmoid heads, rows 20:24 are the
    # device-offset passthrough (identity block in w2_d, bias b4 folded into b2).
    z = (jnp.dot(w2_s, hs, preferred_element_type=f32)
         + jnp.dot(w2_p, hp, preferred_element_type=f32)
         + jnp.dot(w2_d, dv, preferred_element_type=f32)
         + b2)                                                                      # (24, TB)

    row = jax.lax.broadcasted_iota(jnp.int32, z.shape, 0)
    out = jnp.where(row < O_DEV, jax.nn.sigmoid(z), z)

    # one full-tile, lane-dense, unmasked store
    out_ref[...] = out.astype(out_ref.dtype)


# -------------------------- parameter slab packing ----------------------------
def pack_params(params):
    """Packs the 14 decoder tensors into one (80, 56) transposed slab.

    Call ONCE before the ODE/MC loop and pass the result to decoder_forward."""
    (w4, b4, w_inp, b_inp, w_act, b_act, w_deg, b_deg,
     wp_inp, bp_inp, wp_act, bp_act, wp_deg, bp_deg) = params

    slab = jnp.zeros((SLAB_ROWS, SLAB_COLS), jnp.float32)
    # first-layer blocks (transposed) + bias columns
    slab = slab.at[R_SINP:R_SINP + N_HIDDEN, 0:N_IN_STATE].set(w_inp.T)
    slab = slab.at[R_SINP:R_SINP + N_HIDDEN, N_IN_STATE].set(b_inp[0])
    slab = slab.at[R_PINP:R_PINP + N_HIDDEN_PREC, 0:N_IN_PREC].set(wp_inp.T)
    slab = slab.at[R_PINP:R_PINP + N_HIDDEN_PREC, N_IN_PREC].set(bp_inp[0])
    slab = slab.at[R_DEV:R_DEV + N_Y, 0:DEV1HOT_DIM].set(w4.T)
    # fused head block (24, 52): [act|deg] from state hidden, [pact|pdeg] from
    # precision hidden, identity passthrough for device offsets.
    slab = slab.at[R_HEAD + O_ACT:R_HEAD + O_ACT + N_STATE_OUT,
                   H2_STATE:H2_STATE + N_HIDDEN].set(w_act.T)
    slab = slab.at[R_HEAD + O_DEG:R_HEAD + O_DEG + N_STATE_OUT,
                   H2_STATE:H2_STATE + N_HIDDEN].set(w_deg.T)
    slab = slab.at[R_HEAD + O_PACT:R_HEAD + O_PACT + N_PREC_OUT,
                   H2_PREC:H2_PREC + N_HIDDEN_PREC].set(wp_act.T)
    slab = slab.at[R_HEAD + O_PDEG:R_HEAD + O_PDEG + N_PREC_OUT,
                   H2_PREC:H2_PREC + N_HIDDEN_PREC].set(wp_deg.T)
    slab = slab.at[R_HEAD + O_DEV:R_HEAD + O_DEV + N_Y,
                   H2_DEV:H2_DEV + N_Y].set(jnp.eye(N_Y, dtype=jnp.float32))
    # fused head bias column: [b_act | b_deg | bp_act | bp_deg | b4]
    b2 = jnp.concatenate([b_act[0], b_deg[0], bp_act[0], bp_deg[0], b4[0]], axis=0)
    slab = slab.at[R_HEAD:R_HEAD + N_OUT, C_B2].set(b2)
    return slab


# --------------------------------- wrapper ------------------------------------
def _round_up(x, m):
    return (x + m - 1) // m * m


@functools.partial(jax.jit, static_argnames=("batch_tile",))
def decoder_forward(dev1hot_t, x_state_t, x_prec_t, slab, batch_tile=512):
    """One fused evaluation of all Decoder sub-networks.

    Activations carry the batch on the trailing (128-lane) axis:
      dev1hot_t (7, B), x_state_t (24, B), x_prec_t (28, B); slab from pack_params.
    Returns ONE packed (24, B) output slab; rows are
      [0:6 state_act | 6:12 state_deg | 12:16 prec_act | 16:20 prec_deg | 20:24 devoff].
    Index rows at the consumer (or use split_outputs) instead of materializing slices.
    """
    B = x_state_t.shape[1]
    tile_cap = max(128, _round_up(batch_tile, 128))
    b128 = _round_up(B, 128)
    # small call -> single tile / single grid step; large call -> grid >= 2 tiles
    # ("parallel" semantics lets v7x shard the batch tiles across its 2 TensorCores).
    tb = b128 if b128 <= tile_cap else tile_cap
    b_pad = _round_up(B, tb)
    if b_pad != B:
        pad = ((0, 0), (0, b_pad - B))
        dev1hot_t = jnp.pad(dev1hot_t, pad)
        x_state_t = jnp.pad(x_state_t, pad)
        x_prec_t = jnp.pad(x_prec_t, pad)

    grid = (b_pad // tb,)
    out = pl.pallas_call(
        _decoder_kernel,
        out_shape=jax.ShapeDtypeStruct((N_OUT, b_pad), x_state_t.dtype),
        grid_spec=pltpu.PrefetchScalarGridSpec(
            num_scalar_prefetch=0,
            grid=grid,
            in_specs=[
                # batch-tiled activations (full feature dim per block, lane-dense)
                pl.BlockSpec((DEV1HOT_DIM, tb), lambda i: (0, i)),
                pl.BlockSpec((N_IN_STATE, tb), lambda i: (0, i)),
                pl.BlockSpec((N_IN_PREC, tb), lambda i: (0, i)),
                # parameter slab: constant block index -> stays VMEM-resident
                pl.BlockSpec((SLAB_ROWS, SLAB_COLS), lambda i: (0, 0)),
            ],
            out_specs=pl.BlockSpec((N_OUT, tb), lambda i: (0, i)),
        ),
        compiler_params=pltpu.CompilerParams(
            dimension_semantics=("parallel",),
        ),
    )(dev1hot_t, x_state_t, x_prec_t, slab)

    return out if b_pad == B else out[:, :B]


def split_outputs(out_t):
    """Convenience splitter (consumers can instead index the packed slab rows)."""
    devoff = out_t[O_DEV:O_DEV + N_Y].T
    act = out_t[O_ACT:O_ACT + N_STATE_OUT].T
    deg = out_t[O_DEG:O_DEG + N_STATE_OUT].T
    pact = out_t[O_PACT:O_PACT + N_PREC_OUT].T
    pdeg = out_t[O_PDEG:O_PDEG + N_PREC_OUT].T
    return devoff, act, deg, pact, pdeg


# ------------------------- deterministic parameter init ----------------------
def _linear_params(key, fan_in, fan_out):
    # mimics torch.nn.Linear default: U(-1/sqrt(fan_in), 1/sqrt(fan_in))
    kw, kb = jax.random.split(key)
    bound = 1.0 / jnp.sqrt(float(fan_in))
    w = jax.random.uniform(kw, (fan_in, fan_out), jnp.float32, -bound, bound)
    b = jax.random.uniform(kb, (1, fan_out), jnp.float32, -bound, bound)
    return w, b


def make_params(key):
    keys = jax.random.split(key, 7)
    w4, b4 = _linear_params(keys[0], DEV1HOT_DIM, N_Y)
    w_inp, b_inp = _linear_params(keys[1], N_IN_STATE, N_HIDDEN)
    w_act, b_act = _linear_params(keys[2], N_HIDDEN, N_STATE_OUT)
    w_deg, b_deg = _linear_params(keys[3], N_HIDDEN, N_STATE_OUT)
    wp_inp, bp_inp = _linear_params(keys[4], N_IN_PREC, N_HIDDEN_PREC)
    wp_act, bp_act = _linear_params(keys[5], N_HIDDEN_PREC, N_PREC_OUT)
    wp_deg, bp_deg = _linear_params(keys[6], N_HIDDEN_PREC, N_PREC_OUT)
    return (w4, b4, w_inp, b_inp, w_act, b_act, w_deg, b_deg,
            wp_inp, bp_inp, wp_act, bp_act, wp_deg, bp_deg)


# --------------------------------- reference ----------------------------------
def decoder_reference(dev1hot, x_state, x_prec, params):
    # (batch, features) layout, straight transcription of the PyTorch forward math
    (w4, b4, w_inp, b_inp, w_act, b_act, w_deg, b_deg,
     wp_inp, bp_inp, wp_act, bp_act, wp_deg, bp_deg) = params
    devoff = dev1hot @ w4 + b4
    h = jnp.maximum(x_state @ w_inp + b_inp, 0.0)
    act = jax.nn.sigmoid(h @ w_act + b_act)
    deg = jax.nn.sigmoid(h @ w_deg + b_deg)
    hp = jnp.maximum(x_prec @ wp_inp + bp_inp, 0.0)
    pact = jax.nn.sigmoid(hp @ wp_act + bp_act)
    pdeg = jax.nn.sigmoid(hp @ wp_deg + bp_deg)
    return devoff, act, deg, pact, pdeg


# ----------------------------------- main -------------------------------------
if __name__ == "__main__":
    key = jax.random.PRNGKey(0)
    k_params, k_dev, k_state, k_prec = jax.random.split(key, 4)

    params = make_params(k_params)
    # pack parameters ONCE (outside any ODE/MC loop) and reuse the slab every call
    slab = jax.block_until_ready(pack_params(params))

    # batch = 2 traces x 8 MC samples x 16 ODE time points, flattened -> 256 rows.
    # Activations are produced directly in batch-on-lanes layout (features, B),
    # so the wrapper does no repacking/transposing at all.
    B = 2 * 8 * 16
    dev_idx = jax.random.randint(k_dev, (B,), 0, DEV1HOT_DIM)
    dev1hot_t = jax.nn.one_hot(dev_idx, DEV1HOT_DIM, dtype=jnp.float32, axis=0)  # (7, B)
    x_state_t = jax.random.normal(k_state, (N_IN_STATE, B), jnp.float32)          # (24, B)
    x_prec_t = jax.random.normal(k_prec, (N_IN_PREC, B), jnp.float32)             # (28, B)

    out_t = decoder_forward(dev1hot_t, x_state_t, x_prec_t, slab)
    out_t = jax.block_until_ready(out_t)

    outs = split_outputs(out_t)
    refs = decoder_reference(dev1hot_t.T, x_state_t.T, x_prec_t.T, params)
    for o, r in zip(outs, refs):
        assert o.shape == r.shape and o.dtype == r.dtype
        assert jnp.allclose(o, r, atol=1e-5, rtol=1e-4), "mismatch vs reference"

    print("KERNEL_OK")
</pallas_src>

<mosaic_0001>
module attributes {stable_mosaic.version = 11 : i64} {
  func.func @_decoder_kernel(%arg0: i32, %arg1: memref<7x256xf32, #tpu.memory_space<vmem>>, %arg2: memref<24x256xf32, #tpu.memory_space<vmem>>, %arg3: memref<28x256xf32, #tpu.memory_space<vmem>>, %arg4: memref<80x56xf32, #tpu.memory_space<vmem>>, %arg5: memref<24x256xf32, #tpu.memory_space<vmem>>) attributes {dimension_semantics = [#tpu.dimension_semantics<parallel>], iteration_bounds = array<i64: 1>, scalar_prefetch = 0 : i64, scratch_operands = 0 : i64, tpu.core_type = #tpu.core_type<tc>, window_params = [{transform_indices = @transform_0, window_bounds = array<i64: 7, 256>}, {transform_indices = @transform_1, window_bounds = array<i64: 24, 256>}, {transform_indices = @transform_2, window_bounds = array<i64: 28, 256>}, {pipeline_mode = #tpu.pipeline_mode<synchronous>, transform_indices = @transform_3, window_bounds = array<i64: 80, 56>}, {transform_indices = @transform_4, window_bounds = array<i64: 24, 256>}]} {
    %c0 = arith.constant 0 : index
    %c0_0 = arith.constant 0 : index
    %0 = vector.load %arg4[%c0, %c0_0] : memref<80x56xf32, #tpu.memory_space<vmem>>, vector<32x24xf32>
    %c0_1 = arith.constant 0 : index
    %c24 = arith.constant 24 : index
    %1 = vector.load %arg4[%c0_1, %c24] : memref<80x56xf32, #tpu.memory_space<vmem>>, vector<32x1xf32>
    %c32 = arith.constant 32 : index
    %c0_2 = arith.constant 0 : index
    %2 = vector.load %arg4[%c32, %c0_2] : memref<80x56xf32, #tpu.memory_space<vmem>>, vector<16x28xf32>
    %c32_3 = arith.constant 32 : index
    %c28 = arith.constant 28 : index
    %3 = vector.load %arg4[%c32_3, %c28] : memref<80x56xf32, #tpu.memory_space<vmem>>, vector<16x1xf32>
    %c48 = arith.constant 48 : index
    %c0_4 = arith.constant 0 : index
    %4 = vector.load %arg4[%c48, %c0_4] : memref<80x56xf32, #tpu.memory_space<vmem>>, vector<4x7xf32>
    %c56 = arith.constant 56 : index
    %c0_5 = arith.constant 0 : index
    %5 = vector.load %arg4[%c56, %c0_5] : memref<80x56xf32, #tpu.memory_space<vmem>>, vector<24x32xf32>
    %c56_6 = arith.constant 56 : index
    %c32_7 = arith.constant 32 : index
    %6 = vector.load %arg4[%c56_6, %c32_7] : memref<80x56xf32, #tpu.memory_space<vmem>>, vector<24x16xf32>
    %c56_8 = arith.constant 56 : index
    %c48_9 = arith.constant 48 : index
    %7 = vector.load %arg4[%c56_8, %c48_9] : memref<80x56xf32, #tpu.memory_space<vmem>>, vector<24x4xf32>
    %c56_10 = arith.constant 56 : index
    %c52 = arith.constant 52 : index
    %8 = vector.load %arg4[%c56_10, %c52] : memref<80x56xf32, #tpu.memory_space<vmem>>, vector<24x1xf32>
    %c0_11 = arith.constant 0 : index
    %c0_12 = arith.constant 0 : index
    %9 = vector.load %arg2[%c0_11, %c0_12] : memref<24x256xf32, #tpu.memory_space<vmem>>, vector<24x256xf32>
    %cst = arith.constant dense<0.000000e+00> : vector<32x256xf32>
    %10 = tpu.matmul %0, %9, %cst {dimension_numbers = #tpu.dot_dimension_numbers<[1], [0], [0], [1], [0, 0, 1, 1], [], []>} : vector<32x24xf32>, vector<24x256xf32>, vector<32x256xf32> -> vector<32x256xf32>
    %11 = vector.broadcast %1 : vector<32x1xf32> to vector<32x256xf32>
    %12 = arith.addf %10, %11 : vector<32x256xf32>
    %cst_13 = arith.constant 0.000000e+00 : f32
    %13 = vector.broadcast %cst_13 : f32 to vector<32x256xf32>
    %14 = arith.maximumf %12, %13 : vector<32x256xf32>
    %c0_14 = arith.constant 0 : index
    %c0_15 = arith.constant 0 : index
    %15 = vector.load %arg3[%c0_14, %c0_15] : memref<28x256xf32, #tpu.memory_space<vmem>>, vector<28x256xf32>
    %cst_16 = arith.constant dense<0.000000e+00> : vector<16x256xf32>
    %16 = tpu.matmul %2, %15, %cst_16 {dimension_numbers = #tpu.dot_dimension_numbers<[1], [0], [0], [1], [0, 0, 1, 1], [], []>} : vector<16x28xf32>, vector<28x256xf32>, vector<16x256xf32> -> vector<16x256xf32>
    %17 = vector.broadcast %3 : vector<16x1xf32> to vector<16x256xf32>
    %18 = arith.addf %16, %17 : vector<16x256xf32>
    %cst_17 = arith.constant 0.000000e+00 : f32
    %19 = vector.broadcast %cst_17 : f32 to vector<16x256xf32>
    %20 = arith.maximumf %18, %19 : vector<16x256xf32>
    %c0_18 = arith.constant 0 : index
    %c0_19 = arith.constant 0 : index
    %21 = vector.load %arg1[%c0_18, %c0_19] : memref<7x256xf32, #tpu.memory_space<vmem>>, vector<7x256xf32>
    %cst_20 = arith.constant dense<0.000000e+00> : vector<4x256xf32>
    %22 = tpu.matmul %4, %21, %cst_20 {dimension_numbers = #tpu.dot_dimension_numbers<[1], [0], [0], [1], [0, 0, 1, 1], [], []>} : vector<4x7xf32>, vector<7x256xf32>, vector<4x256xf32> -> vector<4x256xf32>
    %cst_21 = arith.constant dense<0.000000e+00> : vector<24x256xf32>
    %23 = tpu.matmul %5, %14, %cst_21 {dimension_numbers = #tpu.dot_dimension_numbers<[1], [0], [0], [1], [0, 0, 1, 1], [], []>} : vector<24x32xf32>, vector<32x256xf32>, vector<24x256xf32> -> vector<24x256xf32>
    %cst_22 = arith.constant dense<0.000000e+00> : vector<24x256xf32>
    %24 = tpu.matmul %6, %20, %cst_22 {dimension_numbers = #tpu.dot_dimension_numbers<[1], [0], [0], [1], [0, 0, 1, 1], [], []>} : vector<24x16xf32>, vector<16x256xf32>, vector<24x256xf32> -> vector<24x256xf32>
    %25 = arith.addf %23, %24 : vector<24x256xf32>
    %cst_23 = arith.constant dense<0.000000e+00> : vector<24x256xf32>
    %26 = tpu.matmul %7, %22, %cst_23 {dimension_numbers = #tpu.dot_dimension_numbers<[1], [0], [0], [1], [0, 0, 1, 1], [], []>} : vector<24x4xf32>, vector<4x256xf32>, vector<24x256xf32> -> vector<24x256xf32>
    %27 = arith.addf %25, %26 : vector<24x256xf32>
    %28 = vector.broadcast %8 : vector<24x1xf32> to vector<24x256xf32>
    %29 = arith.addf %27, %28 : vector<24x256xf32>
    %30 = tpu.iota {dimensions = array<i32: 0>} : vector<24x256xi32>
    %c20_i32 = arith.constant 20 : i32
    %31 = vector.broadcast %c20_i32 : i32 to vector<24x256xi32>
    %32 = arith.cmpi slt, %30, %31 : vector<24x256xi32>
    %33 = arith.negf %29 : vector<24x256xf32>
    %34 = math.exp %33 : vector<24x256xf32>
    %cst_24 = arith.constant 1.000000e+00 : f32
    %35 = vector.broadcast %cst_24 : f32 to vector<24x256xf32>
    %36 = arith.addf %35, %34 : vector<24x256xf32>
    %37 = arith.divf %35, %36 : vector<24x256xf32>
    %38 = arith.select %32, %37, %29 : vector<24x256xi1>, vector<24x256xf32>
    %c0_25 = arith.constant 0 : index
    %c0_26 = arith.constant 0 : index
    %39 = vector.load %arg5[%c0_25, %c0_26] : memref<24x256xf32, #tpu.memory_space<vmem>>, vector<24x256xf32>
    tpu.vector_store %arg5[%c0_25, %c0_26], %38 {strides = array<i32>} : memref<24x256xf32, #tpu.memory_space<vmem>>, vector<24x256xf32>,
    return
  }
  func.func @transform_0(%arg0: i32) -> (i32, i32) {
    %c0_i32 = arith.constant 0 : i32
    %c0_i32_0 = arith.constant 0 : i32
    return %c0_i32, %arg0 : i32, i32
  }
  func.func @transform_1(%arg0: i32) -> (i32, i32) {
    %c0_i32 = arith.constant 0 : i32
    %c0_i32_0 = arith.constant 0 : i32
    return %c0_i32, %arg0 : i32, i32
  }
  func.func @transform_2(%arg0: i32) -> (i32, i32) {
    %c0_i32 = arith.constant 0 : i32
    %c0_i32_0 = arith.constant 0 : i32
    return %c0_i32, %arg0 : i32, i32
  }
  func.func @transform_3(%arg0: i32) -> (i32, i32) {
    %c0_i32 = arith.constant 0 : i32
    %c0_i32_0 = arith.constant 0 : i32
    %c0_i32_1 = arith.constant 0 : i32
    return %c0_i32, %c0_i32_0 : i32, i32
  }
  func.func @transform_4(%arg0: i32) -> (i32, i32) {
    %c0_i32 = arith.constant 0 : i32
    %c0_i32_0 = arith.constant 0 : i32
    return %c0_i32, %arg0 : i32, i32
  }
}

</mosaic_0001>

<llo_original>
// kernel: decoder_forward.1
$region0: #{decoder_forward.1}
  #allocation0 [shape = 'u32[]', space=smem, size = 0x4, offset = 0x4, fixed_abs, tag = 'smem constant byte address 0x4 - core index']
  #allocation1 [shape = 'u32[144,128]{1,0:T(1,128)}', space=vmem, size = 0x12000, scoped, tag = 'internal scratch']
  %s0 = inlined_call_operand.vmem [shape: f32[7,256], index: 0, kind: input, shape index: {}]
  %s1 = inlined_call_operand.vmem [shape: f32[24,256], index: 1, kind: input, shape index: {}]
  %s2 = inlined_call_operand.vmem [shape: f32[28,256], index: 2, kind: input, shape index: {}]
  %s3 = inlined_call_operand.vmem [shape: f32[80,56], index: 3, kind: input, shape index: {}]
  %s4 = inlined_call_operand.hbm [shape: f32[24,256], index: 4, kind: output, shape index: {}]
  %s5 = sld [smem:[#allocation0]]
  $region26: #{decoder_forward.1} parent=0
    _
  %s7 = ssub.s32 1, %s5
  %s8 = scalar_select 0, %s7, %s5
  $region1: #{decoder_forward.1} parent=0
    #allocation2 [shape = 'u8[24576]{0}', space=vmem, size = 0x6000, scoped, tag = 'output window, operand 0, single buffered']
    #allocation3 [shape = 's32[1]{0}', space=sflag, size = 0x4, scoped, tag = 'scoped memory for decoder_forward.1']
    %9 = vsyncpa [#allocation3], 0
    // Predicated region
    $region2: #{decoder_forward.1} parent=1 // pred_check
      _
    $region3: #{decoder_forward.1} parent=1 // pred_check_branch
      %11 = sbr.rel (0) target = $region5
    $region4: #{decoder_forward.1} parent=1 // pred_region
      _
    $region5: #{decoder_forward.1} parent=1 // pred_fallthru
      _
    // Predicated region
    $region6: #{decoder_forward.1} parent=1 // pred_check
      _
    $region7: #{decoder_forward.1} parent=1 // pred_check_branch
      %13 = sbr.rel (0) target = $region9
    $region8: #{decoder_forward.1} parent=1 // pred_region
      _
    $region9: #{decoder_forward.1} parent=1 // pred_fallthru
      _
    // Predicated region
    $region10: #{decoder_forward.1} parent=1 // pred_check
      _
    $region11: #{decoder_forward.1} parent=1 // pred_check_branch
      %15 = sbr.rel (0) target = $region13
    $region12: #{decoder_forward.1} parent=1 // pred_region
      _
    $region13: #{decoder_forward.1} parent=1 // pred_fallthru
      _
    // Predicated region
    $region14: #{decoder_forward.1} parent=1 // pred_check
      _
    $region15: #{decoder_forward.1} parent=1 // pred_check_branch
      %17 = sbr.rel (0) target = $region17
    $region16: #{decoder_forward.1} parent=1 // pred_region
      _
    $region17: #{decoder_forward.1} parent=1 // pred_fallthru
      _
    %v18 = vld [vmem:[%s3] sm:$0xff]
    %v19 = vld [vmem:[%s3 + $0x8] sm:$0xff]
    %v20 = vld [vmem:[%s3 + $0x10] sm:$0xff]
    %v21 = vld [vmem:[%s3 + $0x18] sm:$0xff]
    %v22 = vld [vmem:[%s3 + $0x20] sm:$0xff]
    %v23 = vld [vmem:[%s3 + $0x28] sm:$0xff]
    %v24 = vld [vmem:[%s3 + $0x30] sm:$0xf]
    %v25 = vld [vmem:[%s3 + $0x38] sm:$0xff]
    %v26 = vld [vmem:[%s3 + $0x40] sm:$0xff]
    %v27 = vld [vmem:[%s3 + $0x48] sm:$0xff]
    %v28 = vld [vmem:[%s1] sm:$0xff]
    %v29 = vld [vmem:[%s1 + $0x8] sm:$0xff]
    %v30 = vld [vmem:[%s1 + $0x10] sm:$0xff]
    %v31 = vld [vmem:[%s1 + $0x18] sm:$0xff]
    %v32 = vld [vmem:[%s1 + $0x20] sm:$0xff]
    %v33 = vld [vmem:[%s1 + $0x28] sm:$0xff]
    %35 = vset.pattern.permute.xlu0 24
    %36 = vperm.xlu0 %35, %v18
    %v37 = vpop.permute.xlu0 %36
    %40 = vset.pattern.permute.xlu0 24
    %41 = vperm.xlu0 %40, %v19
    %v42 = vpop.permute.xlu0 %41
    %45 = vset.pattern.permute.xlu0 24
    %46 = vperm.xlu0 %45, %v20
    %v47 = vpop.permute.xlu0 %46
    %50 = vset.pattern.permute.xlu0 24
    %51 = vperm.xlu0 %50, %v21
    %v52 = vpop.permute.xlu0 %51
    %vm54 = vcmask 195584
    %v55 = vsel %vm54, %v18, 0
    %v57 = vsel %vm54, %v19, 0
    %v59 = vsel %vm54, %v20, 0
    %v61 = vsel %vm54, %v21, 0
    %63 = vmatprep.subr.mxu0 %v29
    %64 = vmatpush1.msra.mxu0 %v28
    %65 = vmatprep.subr.mxu0 %v31
    %66 = vmatpush1.msra.mxu0 %v30
    %67 = vmatprep.subr.mxu0 %v33
    %68 = vmatpush1.msra.mxu0 %v32
    %69 = vmatprep.subr.mxu0 0.0
    %70 = vmatpush1.msra.mxu0 0.0
    %71 = vmatprep.subr.mxu0 0.0
    %72 = vmatpush1.msra.mxu0 0.0
    %73 = vmatprep.subr.mxu0 0.0
    %74 = vmatpush1.msra.mxu0 0.0
    %75 = vmatprep.subr.mxu0 0.0
    %76 = vmatpush1.msra.mxu0 0.0
    %77 = vmatprep.subr.mxu0 0.0
    %78 = vmatpush1.msra.mxu0 0.0
    %79 = vmatprep.subr.mxu0 0.0
    %80 = vmatpush1.msra.mxu0 0.0
    %81 = vmatprep.subr.mxu0 0.0
    %82 = vmatpush1.msra.mxu0 0.0
    %83 = vmatprep.subr.mxu0 0.0
    %84 = vmatpush1.msra.mxu0 0.0
    %85 = vmatprep.subr.mxu0 0.0
    %86 = vmatpush1.msra.mxu0 0.0
    %87 = vmatprep.subr.mxu0 0.0
    %88 = vmatpush1.msra.mxu0 0.0
    %89 = vmatprep.subr.mxu0 0.0
    %90 = vmatpush1.msra.mxu0 0.0
    %91 = vmatprep.subr.mxu0 0.0
    %92 = vmatpush1.msra.mxu0 0.0
    %93 = vmatprep.subr.mxu0 0.0
    %94 = vmatpush1.msra.mxu0 0.0
    %95 = vmatprep.subr.mxu0 0.0
    %96 = vmatpush1.msra.mxu0 0.0
    %97 = vmatprep.subr.mxu0 0.0
    %98 = vmatpush1.msra.mxu0 0.0
    %99 = vmatprep.subr.mxu0 0.0
    %100 = vmatpush1.msra.mxu0 0.0
    %101 = vmatprep.subr.mxu0 0.0
    %102 = vmatpush1.msra.mxu0 0.0
    %103 = vmatprep.subr.mxu0 0.0
    %104 = vmatpush1.msra.mxu0 0.0
    %105 = vmatprep.subr.mxu0 0.0
    %106 = vmatpush1.msra.mxu0 0.0
    %107 = vmatprep.subr.mxu0 0.0
    %108 = vmatpush1.msra.mxu0 0.0
    %109 = vmatprep.subr.mxu0 0.0
    %110 = vmatpush1.msra.mxu0 0.0
    %111 = vmatprep.subr.mxu0 0.0
    %112 = vmatpush1.msra.mxu0 0.0
    %113 = vmatprep.subr.mxu0 0.0
    %114 = vmatpush1.msra.mxu0 0.0
    %115 = vmatprep.subr.mxu0 0.0
    %116 = vmatpush1.msra.mxu0 0.0
    %117 = vmatprep.subr.mxu0 0.0
    %118 = vmatpush1.msra.mxu0 0.0
    %119 = vmatprep.subr.mxu0 0.0
    %120 = vmatpush1.msra.mxu0 0.0
    %121 = vmatprep.subr.mxu0 0.0
    %122 = vmatpush1.msra.mxu0 0.0
    %123 = vmatprep.subr.mxu0 0.0
    %124 = vmatpush1.msra.mxu0 0.0
    %125 = vmatprep.subr.mxu0 0.0
    %126 = vmatpush1.msra.mxu0 0.0
    %127 = vmatprep.mubr.f32.mxu0 0.0
    %128 = vmatmul.mubr.f32.gmra.mrb[0].mxu0 %v55
    %v129 = vpop.f32.mrb[0].mxu0
    %v130 = vadd.f32 %v37, %v129
    %v131 = vpop.f32.mrb[0].mxu0
    %v132 = vadd.f32 %v37, %v131
    %133 = vmatprep.mubr.f32.mxu0 0.0
    %134 = vmatmul.mubr.f32.gmra.mrb[0].mxu0 %v57
    %v135 = vpop.f32.mrb[0].mxu0
    %v136 = vadd.f32 %v42, %v135
    %v137 = vpop.f32.mrb[0].mxu0
    %v138 = vadd.f32 %v42, %v137
    %139 = vmatprep.mubr.f32.mxu0 0.0
    %140 = vmatmul.mubr.f32.gmra.mrb[0].mxu0 %v59
    %v141 = vpop.f32.mrb[0].mxu0
    %v142 = vadd.f32 %v47, %v141
    %v143 = vpop.f32.mrb[0].mxu0
    %v144 = vadd.f32 %v47, %v143
    %145 = vmatprep.mubr.f32.mxu0 0.0
    %146 = vmatmul.mubr.f32.gmra.mrb[0].mxu0 %v61
    %v147 = vpop.f32.mrb[0].mxu0
    %v148 = vadd.f32 %v52, %v147
    %v149 = vpop.f32.mrb[0].mxu0
    %v150 = vadd.f32 %v52, %v149
    %151 = vdwg.mxu0
    %v152 = vmax.f32 %v130, 0.0
    %v153 = vmax.f32 %v132, 0.0
    %v154 = vmax.f32 %v136, 0.0
    %v155 = vmax.f32 %v138, 0.0
    %v156 = vmax.f32 %v142, 0.0
    %v157 = vmax.f32 %v144, 0.0
    %v158 = vmax.f32 %v148, 0.0
    %v159 = vmax.f32 %v150, 0.0
    %v160 = vld [vmem:[%s2] sm:$0xff]
    %v161 = vld [vmem:[%s2 + $0x8] sm:$0xff]
    %v162 = vld [vmem:[%s2 + $0x10] sm:$0xff]
    %v163 = vld [vmem:[%s2 + $0x18] sm:$0xff]
    %v164 = vld [vmem:[%s2 + $0x20] sm:$0xff]
    %v165 = vld [vmem:[%s2 + $0x28] sm:$0xff]
    %v166 = vld [vmem:[%s2 + $0x30] sm:$0xf]
    %v167 = vld [vmem:[%s2 + $0x38] sm:$0xf]
    %169 = vset.pattern.permute.xlu0 28
    %170 = vperm.xlu0 %169, %v22
    %v171 = vpop.permute.xlu0 %170
    %174 = vset.pattern.permute.xlu0 28
    %175 = vperm.xlu0 %174, %v23
    %v176 = vpop.permute.xlu0 %175
    %vm178 = vcmask 228352
    %v179 = vsel %vm178, %v22, 0
    %v181 = vsel %vm178, %v23, 0
    %vm183 = vcmask 1043456
    %v185 = vsel %vm183, %v166, 0
    %v188 = vsel %vm183, %v167, 0
    %190 = vmatprep.subr.mxu0 %v161
    %191 = vmatpush1.msra.mxu0 %v160
    %192 = vmatprep.subr.mxu0 %v163
    %193 = vmatpush1.msra.mxu0 %v162
    %194 = vmatprep.subr.mxu0 %v165
    %195 = vmatpush1.msra.mxu0 %v164
    %196 = vmatprep.subr.mxu0 %v188
    %197 = vmatpush1.msra.mxu0 %v185
    %198 = vmatprep.subr.mxu0 0.0
    %199 = vmatpush1.msra.mxu0 0.0
    %200 = vmatprep.subr.mxu0 0.0
    %201 = vmatpush1.msra.mxu0 0.0
    %202 = vmatprep.subr.mxu0 0.0
    %203 = vmatpush1.msra.mxu0 0.0
    %204 = vmatprep.subr.mxu0 0.0
    %205 = vmatpush1.msra.mxu0 0.0
    %206 = vmatprep.subr.mxu0 0.0
    %207 = vmatpush1.msra.mxu0 0.0
    %208 = vmatprep.subr.mxu0 0.0
    %209 = vmatpush1.msra.mxu0 0.0
    %210 = vmatprep.subr.mxu0 0.0
    %211 = vmatpush1.msra.mxu0 0.0
    %212 = vmatprep.subr.mxu0 0.0
    %213 = vmatpush1.msra.mxu0 0.0
    %214 = vmatprep.subr.mxu0 0.0
    %215 = vmatpush1.msra.mxu0 0.0
    %216 = vmatprep.subr.mxu0 0.0
    %217 = vmatpush1.msra.mxu0 0.0
    %218 = vmatprep.subr.mxu0 0.0
    %219 = vmatpush1.msra.mxu0 0.0
    %220 = vmatprep.subr.mxu0 0.0
    %221 = vmatpush1.msra.mxu0 0.0
    %222 = vmatprep.subr.mxu0 0.0
    %223 = vmatpush1.msra.mxu0 0.0
    %224 = vmatprep.subr.mxu0 0.0
    %225 = vmatpush1.msra.mxu0 0.0
    %226 = vmatprep.subr.mxu0 0.0
    %227 = vmatpush1.msra.mxu0 0.0
    %228 = vmatprep.subr.mxu0 0.0
    %229 = vmatpush1.msra.mxu0 0.0
    %230 = vmatprep.subr.mxu0 0.0
    %231 = vmatpush1.msra.mxu0 0.0
    %232 = vmatprep.subr.mxu0 0.0
    %233 = vmatpush1.msra.mxu0 0.0
    %234 = vmatprep.subr.mxu0 0.0
    %235 = vmatpush1.msra.mxu0 0.0
    %236 = vmatprep.subr.mxu0 0.0
    %237 = vmatpush1.msra.mxu0 0.0
    %238 = vmatprep.subr.mxu0 0.0
    %239 = vmatpush1.msra.mxu0 0.0
    %240 = vmatprep.subr.mxu0 0.0
    %241 = vmatpush1.msra.mxu0 0.0
    %242 = vmatprep.subr.mxu0 0.0
    %243 = vmatpush1.msra.mxu0 0.0
    %244 = vmatprep.subr.mxu0 0.0
    %245 = vmatpush1.msra.mxu0 0.0
    %246 = vmatprep.subr.mxu0 0.0
    %247 = vmatpush1.msra.mxu0 0.0
    %248 = vmatprep.subr.mxu0 0.0
    %249 = vmatpush1.msra.mxu0 0.0
    %250 = vmatprep.subr.mxu0 0.0
    %251 = vmatpush1.msra.mxu0 0.0
    %252 = vmatprep.subr.mxu0 0.0
    %253 = vmatpush1.msra.mxu0 0.0
    %254 = vmatprep.mubr.f32.mxu0 0.0
    %255 = vmatmul.mubr.f32.gmra.mrb[0].mxu0 %v179
    %v256 = vpop.f32.mrb[0].mxu0
    %v257 = vadd.f32 %v171, %v256
    %v258 = vpop.f32.mrb[0].mxu0
    %v259 = vadd.f32 %v171, %v258
    %260 = vmatprep.mubr.f32.mxu0 0.0
    %261 = vmatmul.mubr.f32.gmra.mrb[0].mxu0 %v181
    %v262 = vpop.f32.mrb[0].mxu0
    %v263 = vadd.f32 %v176, %v262
    %v264 = vpop.f32.mrb[0].mxu0
    %v265 = vadd.f32 %v176, %v264
    %266 = vdwg.mxu0
    %v267 = vmax.f32 %v257, 0.0
    %v268 = vmax.f32 %v259, 0.0
    %v269 = vmax.f32 %v263, 0.0
    %v270 = vmax.f32 %v265, 0.0
    %v271 = vld [vmem:[%s0] sm:$0x7f]
    %v272 = vld [vmem:[%s0 + $0x8] sm:$0x7f]
    %vm273 = vcmask 56320
    %v275 = vsel %vm273, %v24, 0
    %vm277 = vcmask 1046528
    %v279 = vsel %vm277, %v271, 0
    %v282 = vsel %vm277, %v272, 0
    %284 = vmatprep.subr.mxu0 %v282
    %285 = vmatpush1.msra.mxu0 %v279
    %286 = vmatprep.subr.mxu0 0.0
    %287 = vmatpush1.msra.mxu0 0.0
    %288 = vmatprep.subr.mxu0 0.0
    %289 = vmatpush1.msra.mxu0 0.0
    %290 = vmatprep.subr.mxu0 0.0
    %291 = vmatpush1.msra.mxu0 0.0
    %292 = vmatprep.subr.mxu0 0.0
    %293 = vmatpush1.msra.mxu0 0.0
    %294 = vmatprep.subr.mxu0 0.0
    %295 = vmatpush1.msra.mxu0 0.0
    %296 = vmatprep.subr.mxu0 0.0
    %297 = vmatpush1.msra.mxu0 0.0
    %298 = vmatprep.subr.mxu0 0.0
    %299 = vmatpush1.msra.mxu0 0.0
    %300 = vmatprep.subr.mxu0 0.0
    %301 = vmatpush1.msra.mxu0 0.0
    %302 = vmatprep.subr.mxu0 0.0
    %303 = vmatpush1.msra.mxu0 0.0
    %304 = vmatprep.subr.mxu0 0.0
    %305 = vmatpush1.msra.mxu0 0.0
    %306 = vmatprep.subr.mxu0 0.0
    %307 = vmatpush1.msra.mxu0 0.0
    %308 = vmatprep.subr.mxu0 0.0
    %309 = vmatpush1.msra.mxu0 0.0
    %310 = vmatprep.subr.mxu0 0.0
    %311 = vmatpush1.msra.mxu0 0.0
    %312 = vmatprep.subr.mxu0 0.0
    %313 = vmatpush1.msra.mxu0 0.0
    %314 = vmatprep.subr.mxu0 0.0
    %315 = vmatpush1.msra.mxu0 0.0
    %316 = vmatprep.subr.mxu0 0.0
    %317 = vmatpush1.msra.mxu0 0.0
    %318 = vmatprep.subr.mxu0 0.0
    %319 = vmatpush1.msra.mxu0 0.0
    %320 = vmatprep.subr.mxu0 0.0
    %321 = vmatpush1.msra.mxu0 0.0
    %322 = vmatprep.subr.mxu0 0.0
    %323 = vmatpush1.msra.mxu0 0.0
    %324 = vmatprep.subr.mxu0 0.0
    %325 = vmatpush1.msra.mxu0 0.0
    %326 = vmatprep.subr.mxu0 0.0
    %327 = vmatpush1.msra.mxu0 0.0
    %328 = vmatprep.subr.mxu0 0.0
    %329 = vmatpush1.msra.mxu0 0.0
    %330 = vmatprep.subr.mxu0 0.0
    %331 = vmatpush1.msra.mxu0 0.0
    %332 = vmatprep.subr.mxu0 0.0
    %333 = vmatpush1.msra.mxu0 0.0
    %334 = vmatprep.subr.mxu0 0.0
    %335 = vmatpush1.msra.mxu0 0.0
    %336 = vmatprep.subr.mxu0 0.0
    %337 = vmatpush1.msra.mxu0 0.0
    %338 = vmatprep.subr.mxu0 0.0
    %339 = vmatpush1.msra.mxu0 0.0
    %340 = vmatprep.subr.mxu0 0.0
    %341 = vmatpush1.msra.mxu0 0.0
    %342 = vmatprep.subr.mxu0 0.0
    %343 = vmatpush1.msra.mxu0 0.0
    %344 = vmatprep.subr.mxu0 0.0
    %345 = vmatpush1.msra.mxu0 0.0
    %346 = vmatprep.subr.mxu0 0.0
    %347 = vmatpush1.msra.mxu0 0.0
    %348 = vmatprep.mubr.f32.mxu0 0.0
    %349 = vmatmul.mubr.f32.gmra.mrb[0].mxu0 %v275
    %v350 = vpop.f32.mrb[0].mxu0
    %v351 = vadd.f32 0.0, %v350
    %v352 = vpop.f32.mrb[0].mxu0
    %v353 = vadd.f32 0.0, %v352
    %354 = vdwg.mxu0
    %358 = vrot.lane.b32.xlu0 %v25, 96
    %v359 = vpop.permute.xlu0 %358
    %360 = vrot.lane.b32.xlu0 %v26, 96
    %v361 = vpop.permute.xlu0 %360
    %362 = vrot.lane.b32.xlu0 %v27, 96
    %v363 = vpop.permute.xlu0 %362
    %vm364 = vcmask 130048
    %v365 = vsel %vm364, %v359, 0
    %v367 = vsel %vm364, %v361, 0
    %v369 = vsel %vm364, %v363, 0
    %371 = vmatprep.subr.mxu0 %v268
    %372 = vmatpush1.msra.mxu0 %v267
    %373 = vmatprep.subr.mxu0 %v270
    %374 = vmatpush1.msra.mxu0 %v269
    %375 = vmatprep.subr.mxu0 0.0
    %376 = vmatpush1.msra.mxu0 0.0
    %377 = vmatprep.subr.mxu0 0.0
    %378 = vmatpush1.msra.mxu0 0.0
    %379 = vmatprep.subr.mxu0 0.0
    %380 = vmatpush1.msra.mxu0 0.0
    %381 = vmatprep.subr.mxu0 0.0
    %382 = vmatpush1.msra.mxu0 0.0
    %383 = vmatprep.subr.mxu0 0.0
    %384 = vmatpush1.msra.mxu0 0.0
    %385 = vmatprep.subr.mxu0 0.0
    %386 = vmatpush1.msra.mxu0 0.0
    %387 = vmatprep.subr.mxu0 0.0
    %388 = vmatpush1.msra.mxu0 0.0
    %389 = vmatprep.subr.mxu0 0.0
    %390 = vmatpush1.msra.mxu0 0.0
    %391 = vmatprep.subr.mxu0 0.0
    %392 = vmatpush1.msra.mxu0 0.0
    %393 = vmatprep.subr.mxu0 0.0
    %394 = vmatpush1.msra.mxu0 0.0
    %395 = vmatprep.subr.mxu0 0.0
    %396 = vmatpush1.msra.mxu0 0.0
    %397 = vmatprep.subr.mxu0 0.0
    %398 = vmatpush1.msra.mxu0 0.0
    %399 = vmatprep.subr.mxu0 0.0
    %400 = vmatpush1.msra.mxu0 0.0
    %401 = vmatprep.subr.mxu0 0.0
    %402 = vmatpush1.msra.mxu0 0.0
    %403 = vmatprep.subr.mxu0 0.0
    %404 = vmatpush1.msra.mxu0 0.0
    %405 = vmatprep.subr.mxu0 0.0
    %406 = vmatpush1.msra.mxu0 0.0
    %407 = vmatprep.subr.mxu0 0.0
    %408 = vmatpush1.msra.mxu0 0.0
    %409 = vmatprep.subr.mxu0 0.0
    %410 = vmatpush1.msra.mxu0 0.0
    %411 = vmatprep.subr.mxu0 0.0
    %412 = vmatpush1.msra.mxu0 0.0
    %413 = vmatprep.subr.mxu0 0.0
    %414 = vmatpush1.msra.mxu0 0.0
    %415 = vmatprep.subr.mxu0 0.0
    %416 = vmatpush1.msra.mxu0 0.0
    %417 = vmatprep.subr.mxu0 0.0
    %418 = vmatpush1.msra.mxu0 0.0
    %419 = vmatprep.subr.mxu0 0.0
    %420 = vmatpush1.msra.mxu0 0.0
    %421 = vmatprep.subr.mxu0 0.0
    %422 = vmatpush1.msra.mxu0 0.0
    %423 = vmatprep.subr.mxu0 0.0
    %424 = vmatpush1.msra.mxu0 0.0
    %425 = vmatprep.subr.mxu0 0.0
    %426 = vmatpush1.msra.mxu0 0.0
    %427 = vmatprep.subr.mxu0 0.0
    %428 = vmatpush1.msra.mxu0 0.0
    %429 = vmatprep.subr.mxu0 0.0
    %430 = vmatpush1.msra.mxu0 0.0
    %431 = vmatprep.subr.mxu0 0.0
    %432 = vmatpush1.msra.mxu0 0.0
    %433 = vmatprep.subr.mxu0 0.0
    %434 = vmatpush1.msra.mxu0 0.0
    %435 = vmatprep.mubr.f32.mxu0 0.0
    %436 = vmatmul.mubr.f32.gmra.mrb[0].mxu0 %v365
    %v437 = vpop.f32.mrb[0].mxu0
    %v438 = vadd.f32 0.0, %v437
    %v439 = vpop.f32.mrb[0].mxu0
    %v440 = vadd.f32 0.0, %v439
    %441 = vmatprep.mubr.f32.mxu0 0.0
    %442 = vmatmul.mubr.f32.gmra.mrb[0].mxu0 %v367
    %v443 = vpop.f32.mrb[0].mxu0
    %v444 = vadd.f32 0.0, %v443
    %v445 = vpop.f32.mrb[0].mxu0
    %v446 = vadd.f32 0.0, %v445
    %447 = vmatprep.mubr.f32.mxu0 0.0
    %448 = vmatmul.mubr.f32.gmra.mrb[0].mxu0 %v369
    %v449 = vpop.f32.mrb[0].mxu0
    %v450 = vadd.f32 0.0, %v449
    %v451 = vpop.f32.mrb[0].mxu0
    %v452 = vadd.f32 0.0, %v451
    %453 = vdwg.mxu0
    %vm454 = vcmask 261120
    %v455 = vsel %vm454, %v25, 0
    %v457 = vsel %vm454, %v26, 0
    %v459 = vsel %vm454, %v27, 0
    %461 = vmatprep.subr.mxu0 %v153
    %462 = vmatpush1.msra.mxu0 %v152
    %463 = vmatprep.subr.mxu0 %v155
    %464 = vmatpush1.msra.mxu0 %v154
    %465 = vmatprep.subr.mxu0 %v157
    %466 = vmatpush1.msra.mxu0 %v156
    %467 = vmatprep.subr.mxu0 %v159
    %468 = vmatpush1.msra.mxu0 %v158
    %469 = vmatprep.subr.mxu0 0.0
    %470 = vmatpush1.msra.mxu0 0.0
    %471 = vmatprep.subr.mxu0 0.0
    %472 = vmatpush1.msra.mxu0 0.0
    %473 = vmatprep.subr.mxu0 0.0
    %474 = vmatpush1.msra.mxu0 0.0
    %475 = vmatprep.subr.mxu0 0.0
    %476 = vmatpush1.msra.mxu0 0.0
    %477 = vmatprep.subr.mxu0 0.0
    %478 = vmatpush1.msra.mxu0 0.0
    %479 = vmatprep.subr.mxu0 0.0
    %480 = vmatpush1.msra.mxu0 0.0
    %481 = vmatprep.subr.mxu0 0.0
    %482 = vmatpush1.msra.mxu0 0.0
    %483 = vmatprep.subr.mxu0 0.0
    %484 = vmatpush1.msra.mxu0 0.0
    %485 = vmatprep.subr.mxu0 0.0
    %486 = vmatpush1.msra.mxu0 0.0
    %487 = vmatprep.subr.mxu0 0.0
    %488 = vmatpush1.msra.mxu0 0.0
    %489 = vmatprep.subr.mxu0 0.0
    %490 = vmatpush1.msra.mxu0 0.0
    %491 = vmatprep.subr.mxu0 0.0
    %492 = vmatpush1.msra.mxu0 0.0
    %493 = vmatprep.subr.mxu0 0.0
    %494 = vmatpush1.msra.mxu0 0.0
    %495 = vmatprep.subr.mxu0 0.0
    %496 = vmatpush1.msra.mxu0 0.0
    %497 = vmatprep.subr.mxu0 0.0
    %498 = vmatpush1.msra.mxu0 0.0
    %499 = vmatprep.subr.mxu0 0.0
    %500 = vmatpush1.msra.mxu0 0.0
    %501 = vmatprep.subr.mxu0 0.0
    %502 = vmatpush1.msra.mxu0 0.0
    %503 = vmatprep.subr.mxu0 0.0
    %504 = vmatpush1.msra.mxu0 0.0
    %505 = vmatprep.subr.mxu0 0.0
    %506 = vmatpush1.msra.mxu0 0.0
    %507 = vmatprep.subr.mxu0 0.0
    %508 = vmatpush1.msra.mxu0 0.0
    %509 = vmatprep.subr.mxu0 0.0
    %510 = vmatpush1.msra.mxu0 0.0
    %511 = vmatprep.subr.mxu0 0.0
    %512 = vmatpush1.msra.mxu0 0.0
    %513 = vmatprep.subr.mxu0 0.0
    %514 = vmatpush1.msra.mxu0 0.0
    %515 = vmatprep.subr.mxu0 0.0
    %516 = vmatpush1.msra.mxu0 0.0
    %517 = vmatprep.subr.mxu0 0.0
    %518 = vmatpush1.msra.mxu0 0.0
    %519 = vmatprep.subr.mxu0 0.0
    %520 = vmatpush1.msra.mxu0 0.0
    %521 = vmatprep.subr.mxu0 0.0
    %522 = vmatpush1.msra.mxu0 0.0
    %523 = vmatprep.subr.mxu0 0.0
    %524 = vmatpush1.msra.mxu0 0.0
    %525 = vmatprep.mubr.f32.mxu0 0.0
    %526 = vmatmul.mubr.f32.gmra.mrb[0].mxu0 %v455
    %v527 = vpop.f32.mrb[0].mxu0
    %v528 = vadd.f32 %v438, %v527
    %v529 = vpop.f32.mrb[0].mxu0
    %v530 = vadd.f32 %v440, %v529
    %531 = vmatprep.mubr.f32.mxu0 0.0
    %532 = vmatmul.mubr.f32.gmra.mrb[0].mxu0 %v457
    %v533 = vpop.f32.mrb[0].mxu0
    %v534 = vadd.f32 %v444, %v533
    %v535 = vpop.f32.mrb[0].mxu0
    %v536 = vadd.f32 %v446, %v535
    %537 = vmatprep.mubr.f32.mxu0 0.0
    %538 = vmatmul.mubr.f32.gmra.mrb[0].mxu0 %v459
    %v539 = vpop.f32.mrb[0].mxu0
    %v540 = vadd.f32 %v450, %v539
    %v541 = vpop.f32.mrb[0].mxu0
    %v542 = vadd.f32 %v452, %v541
    %543 = vdwg.mxu0
    %544 = vrot.lane.b32.xlu0 %v25, 80
    %v545 = vpop.permute.xlu0 %544
    %546 = vrot.lane.b32.xlu0 %v26, 80
    %v547 = vpop.permute.xlu0 %546
    %548 = vrot.lane.b32.xlu0 %v27, 80
    %v549 = vpop.permute.xlu0 %548
    %vm550 = vcmask 31744
    %v551 = vsel %vm550, %v545, 0
    %v553 = vsel %vm550, %v547, 0
    %v555 = vsel %vm550, %v549, 0
    %v558 = vsel %vm183, %v351, 0
    %v561 = vsel %vm183, %v353, 0
    %563 = vmatprep.subr.mxu0 %v561
    %564 = vmatpush1.msra.mxu0 %v558
    %565 = vmatprep.subr.mxu0 0.0
    %566 = vmatpush1.msra.mxu0 0.0
    %567 = vmatprep.subr.mxu0 0.0
    %568 = vmatpush1.msra.mxu0 0.0
    %569 = vmatprep.subr.mxu0 0.0
    %570 = vmatpush1.msra.mxu0 0.0
    %571 = vmatprep.subr.mxu0 0.0
    %572 = vmatpush1.msra.mxu0 0.0
    %573 = vmatprep.subr.mxu0 0.0
    %574 = vmatpush1.msra.mxu0 0.0
    %575 = vmatprep.subr.mxu0 0.0
    %576 = vmatpush1.msra.mxu0 0.0
    %577 = vmatprep.subr.mxu0 0.0
    %578 = vmatpush1.msra.mxu0 0.0
    %579 = vmatprep.subr.mxu0 0.0
    %580 = vmatpush1.msra.mxu0 0.0
    %581 = vmatprep.subr.mxu0 0.0
    %582 = vmatpush1.msra.mxu0 0.0
    %583 = vmatprep.subr.mxu0 0.0
    %584 = vmatpush1.msra.mxu0 0.0
    %585 = vmatprep.subr.mxu0 0.0
    %586 = vmatpush1.msra.mxu0 0.0
    %587 = vmatprep.subr.mxu0 0.0
    %588 = vmatpush1.msra.mxu0 0.0
    %589 = vmatprep.subr.mxu0 0.0
    %590 = vmatpush1.msra.mxu0 0.0
    %591 = vmatprep.subr.mxu0 0.0
    %592 = vmatpush1.msra.mxu0 0.0
    %593 = vmatprep.subr.mxu0 0.0
    %594 = vmatpush1.msra.mxu0 0.0
    %595 = vmatprep.subr.mxu0 0.0
    %596 = vmatpush1.msra.mxu0 0.0
    %597 = vmatprep.subr.mxu0 0.0
    %598 = vmatpush1.msra.mxu0 0.0
    %599 = vmatprep.subr.mxu0 0.0
    %600 = vmatpush1.msra.mxu0 0.0
    %601 = vmatprep.subr.mxu0 0.0
    %602 = vmatpush1.msra.mxu0 0.0
    %603 = vmatprep.subr.mxu0 0.0
    %604 = vmatpush1.msra.mxu0 0.0
    %605 = vmatprep.subr.mxu0 0.0
    %606 = vmatpush1.msra.mxu0 0.0
    %607 = vmatprep.subr.mxu0 0.0
    %608 = vmatpush1.msra.mxu0 0.0
    %609 = vmatprep.subr.mxu0 0.0
    %610 = vmatpush1.msra.mxu0 0.0
    %611 = vmatprep.subr.mxu0 0.0
    %612 = vmatpush1.msra.mxu0 0.0
    %613 = vmatprep.subr.mxu0 0.0
    %614 = vmatpush1.msra.mxu0 0.0
    %615 = vmatprep.subr.mxu0 0.0
    %616 = vmatpush1.msra.mxu0 0.0
    %617 = vmatprep.subr.mxu0 0.0
    %618 = vmatpush1.msra.mxu0 0.0
    %619 = vmatprep.subr.mxu0 0.0
    %620 = vmatpush1.msra.mxu0 0.0
    %621 = vmatprep.subr.mxu0 0.0
    %622 = vmatpush1.msra.mxu0 0.0
    %623 = vmatprep.subr.mxu0 0.0
    %624 = vmatpush1.msra.mxu0 0.0
    %625 = vmatprep.subr.mxu0 0.0
    %626 = vmatpush1.msra.mxu0 0.0
    %627 = vmatprep.mubr.f32.mxu0 0.0
    %628 = vmatmul.mubr.f32.gmra.mrb[0].mxu0 %v551
    %v629 = vpop.f32.mrb[0].mxu0
    %v630 = vadd.f32 0.0, %v629
    %v631 = vpop.f32.mrb[0].mxu0
    %v632 = vadd.f32 0.0, %v631
    %633 = vmatprep.mubr.f32.mxu0 0.0
    %634 = vmatmul.mubr.f32.gmra.mrb[0].mxu0 %v553
    %v635 = vpop.f32.mrb[0].mxu0
    %v636 = vadd.f32 0.0, %v635
    %v637 = vpop.f32.mrb[0].mxu0
    %v638 = vadd.f32 0.0, %v637
    %639 = vmatprep.mubr.f32.mxu0 0.0
    %640 = vmatmul.mubr.f32.gmra.mrb[0].mxu0 %v555
    %v641 = vpop.f32.mrb[0].mxu0
    %v642 = vadd.f32 0.0, %v641
    %v643 = vpop.f32.mrb[0].mxu0
    %v644 = vadd.f32 0.0, %v643
    %645 = vdwg.mxu0
    %v646 = vadd.f32 %v528, %v630
    %v647 = vadd.f32 %v530, %v632
    %v648 = vadd.f32 %v534, %v636
    %v649 = vadd.f32 %v536, %v638
    %v650 = vadd.f32 %v540, %v642
    %v651 = vadd.f32 %v542, %v644
    %652 = vset.pattern.permute.xlu0 52
    %653 = vperm.xlu0 %652, %v25
    %v654 = vpop.permute.xlu0 %653
    %656 = vset.pattern.permute.xlu0 52
    %657 = vperm.xlu0 %656, %v26
    %v658 = vpop.permute.xlu0 %657
    %660 = vset.pattern.permute.xlu0 52
    %661 = vperm.xlu0 %660, %v27
    %v662 = vpop.permute.xlu0 %661
    %v664 = vadd.f32 %v646, %v654
    %v665 = vadd.f32 %v647, %v654
    %v666 = vadd.f32 %v648, %v658
    %v667 = vadd.f32 %v649, %v658
    %v668 = vadd.f32 %v650, %v662
    %v669 = vadd.f32 %v651, %v662
    %v670 = vlaneseq
    %v671 = vshrl.u32 %v670, 7
    %v672 = vadd.s32 %v671, 8
    %v673 = vadd.s32 %v671, 16
    %vm674 = vcmp.lt.s32.totalorder %v671, 20
    %vm675 = vcmp.lt.s32.totalorder %v672, 20
    %vm676 = vcmp.lt.s32.totalorder %v673, 20
    %v677 = vxor.u32 %v664, 2147483648
    %v678 = vxor.u32 %v665, 2147483648
    %v679 = vxor.u32 %v666, 2147483648
    %v680 = vxor.u32 %v667, 2147483648
    %v681 = vxor.u32 %v668, 2147483648
    %v682 = vxor.u32 %v669, 2147483648
    %v683 = vmul.f32 %v677, 1.442695
    %v684 = vpow.pop %v683
    %v685 = vmul.f32 %v678, 1.442695
    %v686 = vpow.pop %v685
    %v687 = vmul.f32 %v679, 1.442695
    %v688 = vpow.pop %v687
    %v689 = vmul.f32 %v680, 1.442695
    %v690 = vpow.pop %v689
    %v691 = vmul.f32 %v681, 1.442695
    %v692 = vpow.pop %v691
    %v693 = vmul.f32 %v682, 1.442695
    %v694 = vpow.pop %v693
    %v695 = vadd.f32 %v684, 1.0
    %v696 = vadd.f32 %v686, 1.0
    %v697 = vadd.f32 %v688, 1.0
    %v698 = vadd.f32 %v690, 1.0
    %v699 = vadd.f32 %v692, 1.0
    %v700 = vadd.f32 %v694, 1.0
    %v701 = vrcp.pop %v695
    %v702 = vmul.f32 1.0, %v701
    %v703 = vrcp.pop %v696
    %v704 = vmul.f32 1.0, %v703
    %v705 = vrcp.pop %v697
    %v706 = vmul.f32 1.0, %v705
    %v707 = vrcp.pop %v698
    %v708 = vmul.f32 1.0, %v707
    %v709 = vrcp.pop %v699
    %v710 = vmul.f32 1.0, %v709
    %v711 = vrcp.pop %v700
    %v712 = vmul.f32 1.0, %v711
    %v713 = vsel %vm674, %v702, %v664
    %v714 = vsel %vm674, %v704, %v665
    %v715 = vsel %vm675, %v706, %v666
    %v716 = vsel %vm675, %v708, %v667
    %v717 = vsel %vm676, %v710, %v668
    %v718 = vsel %vm676, %v712, %v669
    %719 = vst [vmem:[#allocation2] sm:$0xff] %v713
    %720 = vst [vmem:[#allocation2 + $0x8] sm:$0xff] %v714
    %721 = vst [vmem:[#allocation2 + $0x10] sm:$0xff] %v715
    %722 = vst [vmem:[#allocation2 + $0x18] sm:$0xff] %v716
    %723 = vst [vmem:[#allocation2 + $0x20] sm:$0xff] %v717
    %724 = vst [vmem:[#allocation2 + $0x28] sm:$0xff] %v718
    // Predicated region
    $region18: #{decoder_forward.1} parent=1 // pred_check
      _
    $region19: #{decoder_forward.1} parent=1 // pred_check_branch
      %726 = sbr.rel (0) target = $region21
    $region20: #{decoder_forward.1} parent=1 // pred_region
      %s728 = ssub.s32 768, 768
      %729 = vsyncadd [#allocation3], %s728
      %s730 = sshll.u32 [#allocation2], 4
      %s731 = int_to_ptr.vmem [resolvable:$true] %s730
      %736 = dma.vmem_to_hbm [thread:$0]  %s731, 768, %s4, [#allocation3], 256, 256, 16
    $region21: #{decoder_forward.1} parent=1 // pred_fallthru
      _
    // Predicated region
    $region22: #{decoder_forward.1} parent=1 // pred_check
      _
    $region23: #{decoder_forward.1} parent=1 // pred_check_branch
      %738 = sbr.rel (0) target = $region25
    $region24: #{decoder_forward.1} parent=1 // pred_region
      %739 = dma.done [#allocation3], 768
    $region25: #{decoder_forward.1} parent=1 // pred_fallthru
      _
    %740 = vsyncpa [#allocation3], 1

</llo_original>
